<compile_context>
chip_gen: v5e
topology: v5e:2x2
jax: 0.10.0
libtpu: 0.0.40
codegen_flags: <defaults>
</compile_context>

<pallas_src>
import functools

import jax
import jax.numpy as jnp
from jax.experimental import pallas as pl
from jax.experimental.pallas import tpu as pltpu


def _diffusion_kernel(steps, latent,
                      mask_ref,                        # SMEM (steps,) f32
                      x0_ref,                          # VMEM (C, Tn)
                      encw_ref, encb_ref,              # VMEM (2L, C), (2L, 1)
                      decw_ref, decb_ref,              # VMEM (C, L),  (C, 1)
                      eps_ref,                         # VMEM (steps, L, Tn)
                      x_out_ref,                       # VMEM (C, Tn)   out
                      zlist_ref):                      # VMEM (steps, L, Tn) out
    x0 = x0_ref[...]
    enc_w = encw_ref[...]
    enc_b = encb_ref[...]
    dec_w = decw_ref[...]
    dec_b = decb_ref[...]

    def encode(x):                                     # (C, Tn) -> 2x (L, Tn)
        h = jnp.dot(enc_w, x, preferred_element_type=jnp.float32) + enc_b
        return h[:latent, :], h[latent:, :]

    def decode(z):                                     # (L, Tn) -> (C, Tn)
        return jnp.dot(dec_w, z, preferred_element_type=jnp.float32) + dec_b

    z_mu, z_logvar = encode(x0)
    z_std = jnp.exp(0.5 * z_logvar)

    # All per-step samples z_k = mu + std * eps_k in one batched VPU op
    # (lane-dense f32 store of the whole z_list slab).
    eps = eps_ref[...].astype(jnp.float32)             # bf16 -> f32 (free VPU cast)
    z_samples = z_mu[None] + z_std[None] * eps         # (steps, L, Tn)
    zlist_ref[...] = z_samples

    # Only the final step's mask/dz correction reaches the decoder output
    # (the per-step carry is discarded by the reference; see header note).
    z_last = z_samples[steps - 1]
    mask = mask_ref[steps - 1]                         # spatially-uniform scalar
    mu_new, _ = encode(decode(z_last))                 # z_stddev_new unused in ref
    dz = (mu_new - z_last) / z_std                     # divide by ORIGINAL std
    z_final = z_last + mask * dz
    x_out_ref[...] = decode(z_final)


def diffusion_forward(x0_nchw, enc_w, enc_b, dec_w, dec_b, eps, timesteps,
                      *, tile_n=None):
    """Fused DiffusionModel.forward.

    x0_nchw: (b, c, h, w)
    enc_w:   (2*latent, c)  1x1-conv encoder weight -> (mu, logvar)
    enc_b:   (2*latent,)
    dec_w:   (c, latent)    1x1-conv decoder weight
    dec_b:   (c,)
    eps:     (steps, latent, b*h*w) pre-drawn noise (bf16 or f32)
    timesteps: (steps + 1,)
    Returns (x, z_list): x (b,c,h,w), z_list is a list of (b,latent,h,w).
    """
    b, c, h, w = x0_nchw.shape
    steps, latent, n = eps.shape
    assert n == b * h * w
    two_l = 2 * latent

    if tile_n is None:
        # Largest lane tile (multiple of 128) that divides N; big tiles amortize
        # the ~0.35us/grid-step overhead; cap keeps VMEM modest on v7x (64 MiB).
        tile_n = next((t for t in (2048, 1024, 512, 256, 128) if n % t == 0), n)
    grid = (n // tile_n,)

    # NCHW -> features-major (C, N): channels on sublanes, pixels on lanes.
    x0_cn = jnp.transpose(x0_nchw, (1, 0, 2, 3)).reshape(c, n).astype(jnp.float32)

    # TODO(synk): GaussianDiffusion is not defined in the reference; modeled
    # as a spatially-uniform mask equal to (t_{k+1} - t_k).
    mask = (timesteps[1:steps + 1] - timesteps[:steps]).astype(jnp.float32)

    kernel = functools.partial(_diffusion_kernel, steps, latent)

    pix2 = lambda i: (0, i)          # blocked along the pixel (lane) axis
    pix3 = lambda i: (0, 0, i)
    resident = lambda i: (0, 0)      # weights/biases: same block every tile

    grid_spec = pltpu.PrefetchScalarGridSpec(
        num_scalar_prefetch=0,
        grid=grid,
        in_specs=[
            pl.BlockSpec(memory_space=pltpu.MemorySpace.SMEM),        # mask
            pl.BlockSpec((c, tile_n), pix2),                          # x0
            pl.BlockSpec((two_l, c), resident),                       # enc_w
            pl.BlockSpec((two_l, 1), resident),                       # enc_b
            pl.BlockSpec((c, latent), resident),                      # dec_w
            pl.BlockSpec((c, 1), resident),                           # dec_b
            pl.BlockSpec((steps, latent, tile_n), pix3),              # eps
        ],
        out_specs=(
            pl.BlockSpec((c, tile_n), pix2),                          # x_out
            pl.BlockSpec((steps, latent, tile_n), pix3),              # z_list
        ),
    )

    x_cn, zlist = pl.pallas_call(
        kernel,
        out_shape=(
            jax.ShapeDtypeStruct((c, n), jnp.float32),
            jax.ShapeDtypeStruct((steps, latent, n), jnp.float32),
        ),
        grid_spec=grid_spec,
        compiler_params=pltpu.CompilerParams(
            dimension_semantics=("parallel",)),       # per-pixel-tile, 2 TCs on v7x
    )(
        mask,
        x0_cn,
        enc_w.astype(jnp.float32),
        enc_b.reshape(two_l, 1).astype(jnp.float32),
        dec_w.astype(jnp.float32),
        dec_b.reshape(c, 1).astype(jnp.float32),
        eps,                                          # native dtype (bf16 ok)
    )

    # Back to PyTorch NCHW; ONE batched transpose for the whole z_list stack.
    x = x_cn.reshape(c, b, h, w).transpose(1, 0, 2, 3)
    z_stack = zlist.reshape(steps, latent, b, h, w).transpose(0, 2, 1, 3, 4)
    z_list = [z_stack[k] for k in range(steps)]
    return x, z_list


def _reference_forward(x0_nchw, enc_w, enc_b, dec_w, dec_b, eps, timesteps):
    """Pure-JAX transcription of the PyTorch forward (loop kept verbatim)."""
    b, c, h, w = x0_nchw.shape
    steps, latent, n = eps.shape
    x0 = jnp.transpose(x0_nchw, (1, 0, 2, 3)).reshape(c, n).astype(jnp.float32)
    ew = enc_w.astype(jnp.float32)
    eb = enc_b.reshape(-1, 1).astype(jnp.float32)
    dw = dec_w.astype(jnp.float32)
    db = dec_b.reshape(-1, 1).astype(jnp.float32)

    def encode(x):
        hh = ew @ x + eb
        return hh[:latent], hh[latent:]

    def decode(z):
        return dw @ z + db

    z_mu, z_logvar = encode(x0)
    z_std = jnp.exp(0.5 * z_logvar)
    z_list = []
    z = z_mu
    for k in range(steps):
        z = z_mu + z_std * eps[k].astype(jnp.float32)
        z_list.append(z)
        mask = timesteps[k + 1] - timesteps[k]
        mu_new, logvar_new = encode(decode(z))
        _ = jnp.exp(0.5 * logvar_new)   # z_stddev_new: computed, unused (as in ref)
        dz = (mu_new - z) / z_std
        z = z + mask * dz
    x = decode(z)
    x = x.reshape(c, b, h, w).transpose(1, 0, 2, 3)
    z_list = [zz.reshape(latent, b, h, w).transpose(1, 0, 2, 3) for zz in z_list]
    return x, z_list


if __name__ == "__main__":
    key = jax.random.PRNGKey(0)
    b, c, h, w = 2, 4, 16, 16
    latent = 8
    diffusion_steps = 4
    n = b * h * w

    k1, k2, k3, k4, k5, k6 = jax.random.split(key, 6)
    x0 = jax.random.normal(k1, (b, c, h, w), jnp.float32)
    enc_w = 0.1 * jax.random.normal(k2, (2 * latent, c), jnp.float32)
    enc_b = 0.1 * jax.random.normal(k3, (2 * latent,), jnp.float32)
    dec_w = 0.1 * jax.random.normal(k4, (c, latent), jnp.float32)
    dec_b = 0.1 * jax.random.normal(k5, (c,), jnp.float32)
    # Pre-drawn randn_like noise for every step, kept bf16 end-to-end (halves
    # HBM traffic of the largest input); the kernel upcasts in-register.
    eps = jax.random.normal(k6, (diffusion_steps, latent, n), jnp.float32)
    eps = eps.astype(jnp.bfloat16)

    # TODO(synk): the reference's default timesteps (len == diffusion_steps)
    # would index out of range at timesteps[steps]; pass steps+1 timesteps.
    timesteps = jnp.linspace(0.0, 1.0, diffusion_steps + 1, dtype=jnp.float32)

    # tile_n=256 exercises a 2-point pixel grid at this toy size; production
    # sizes auto-pick 512-2048 lane tiles (tile_n=None).
    x, z_list = diffusion_forward(x0, enc_w, enc_b, dec_w, dec_b, eps,
                                  timesteps, tile_n=256)
    jax.block_until_ready(x)
    jax.block_until_ready(z_list)

    assert x.shape == (b, c, h, w)
    assert len(z_list) == diffusion_steps
    assert all(z.shape == (b, latent, h, w) for z in z_list)

    # Validate against the verbatim-loop pure-JAX reference.
    x_ref, z_ref = _reference_forward(x0, enc_w, enc_b, dec_w, dec_b, eps,
                                      timesteps)
    assert jnp.allclose(x, x_ref, atol=5e-3, rtol=5e-3)
    for zk, zrk in zip(z_list, z_ref):
        assert jnp.allclose(zk, zrk, atol=5e-3, rtol=5e-3)

    print("KERNEL_OK")
</pallas_src>

<mosaic_0001>
module attributes {stable_mosaic.version = 11 : i64} {
  func.func @_diffusion_kernel(%arg0: i32, %arg1: memref<4xf32, #tpu.memory_space<smem>>, %arg2: memref<4x256xf32, #tpu.memory_space<vmem>>, %arg3: memref<16x4xf32, #tpu.memory_space<vmem>>, %arg4: memref<16x1xf32, #tpu.memory_space<vmem>>, %arg5: memref<4x8xf32, #tpu.memory_space<vmem>>, %arg6: memref<4x1xf32, #tpu.memory_space<vmem>>, %arg7: memref<4x8x256xbf16, #tpu.memory_space<vmem>>, %arg8: memref<4x256xf32, #tpu.memory_space<vmem>>, %arg9: memref<4x8x256xf32, #tpu.memory_space<vmem>>) attributes {dimension_semantics = [#tpu.dimension_semantics<parallel>], iteration_bounds = array<i64: 2>, scalar_prefetch = 0 : i64, scratch_operands = 0 : i64, tpu.core_type = #tpu.core_type<tc>, window_params = [{transform_indices = @transform_0, window_bounds = array<i64: 4>}, {transform_indices = @transform_1, window_bounds = array<i64: 4, 256>}, {pipeline_mode = #tpu.pipeline_mode<synchronous>, transform_indices = @transform_2, window_bounds = array<i64: 16, 4>}, {pipeline_mode = #tpu.pipeline_mode<synchronous>, transform_indices = @transform_3, window_bounds = array<i64: 16, 1>}, {pipeline_mode = #tpu.pipeline_mode<synchronous>, transform_indices = @transform_4, window_bounds = array<i64: 4, 8>}, {pipeline_mode = #tpu.pipeline_mode<synchronous>, transform_indices = @transform_5, window_bounds = array<i64: 4, 1>}, {transform_indices = @transform_6, window_bounds = array<i64: 4, 8, 256>}, {transform_indices = @transform_7, window_bounds = array<i64: 4, 256>}, {transform_indices = @transform_8, window_bounds = array<i64: 4, 8, 256>}]} {
    %c0 = arith.constant 0 : index
    %c0_0 = arith.constant 0 : index
    %0 = vector.load %arg2[%c0, %c0_0] : memref<4x256xf32, #tpu.memory_space<vmem>>, vector<4x256xf32>
    %c0_1 = arith.constant 0 : index
    %c0_2 = arith.constant 0 : index
    %1 = vector.load %arg3[%c0_1, %c0_2] : memref<16x4xf32, #tpu.memory_space<vmem>>, vector<16x4xf32>
    %c0_3 = arith.constant 0 : index
    %c0_4 = arith.constant 0 : index
    %2 = vector.load %arg4[%c0_3, %c0_4] : memref<16x1xf32, #tpu.memory_space<vmem>>, vector<16x1xf32>
    %c0_5 = arith.constant 0 : index
    %c0_6 = arith.constant 0 : index
    %3 = vector.load %arg5[%c0_5, %c0_6] : memref<4x8xf32, #tpu.memory_space<vmem>>, vector<4x8xf32>
    %c0_7 = arith.constant 0 : index
    %c0_8 = arith.constant 0 : index
    %4 = vector.load %arg6[%c0_7, %c0_8] : memref<4x1xf32, #tpu.memory_space<vmem>>, vector<4x1xf32>
    %cst = arith.constant dense<0.000000e+00> : vector<16x256xf32>
    %5 = tpu.matmul %1, %0, %cst {dimension_numbers = #tpu.dot_dimension_numbers<[1], [0], [0], [1], [0, 0, 1, 1], [], []>} : vector<16x4xf32>, vector<4x256xf32>, vector<16x256xf32> -> vector<16x256xf32>
    %6 = vector.broadcast %2 : vector<16x1xf32> to vector<16x256xf32>
    %7 = arith.addf %5, %6 : vector<16x256xf32>
    %8 = vector.extract_strided_slice %7 {offsets = [0, 0], sizes = [8, 256], strides = [1, 1]} : vector<16x256xf32> to vector<8x256xf32>
    %9 = vector.extract_strided_slice %7 {offsets = [8, 0], sizes = [8, 256], strides = [1, 1]} : vector<16x256xf32> to vector<8x256xf32>
    %cst_9 = arith.constant 5.000000e-01 : f32
    %10 = vector.broadcast %cst_9 : f32 to vector<8x256xf32>
    %11 = arith.mulf %10, %9 : vector<8x256xf32>
    %12 = math.exp %11 : vector<8x256xf32>
    %c0_10 = arith.constant 0 : index
    %c0_11 = arith.constant 0 : index
    %c0_12 = arith.constant 0 : index
    %13 = vector.load %arg7[%c0_10, %c0_11, %c0_12] : memref<4x8x256xbf16, #tpu.memory_space<vmem>>, vector<4x8x256xbf16>
    %14 = arith.extf %13 : vector<4x8x256xbf16> to vector<4x8x256xf32>
    %15 = vector.shape_cast %8 : vector<8x256xf32> to vector<1x8x256xf32>
    %16 = vector.shape_cast %12 : vector<8x256xf32> to vector<1x8x256xf32>
    %17 = vector.broadcast %16 : vector<1x8x256xf32> to vector<4x8x256xf32>
    %18 = arith.mulf %17, %14 : vector<4x8x256xf32>
    %19 = vector.broadcast %15 : vector<1x8x256xf32> to vector<4x8x256xf32>
    %20 = arith.addf %19, %18 : vector<4x8x256xf32>
    %c0_13 = arith.constant 0 : index
    %c0_14 = arith.constant 0 : index
    %c0_15 = arith.constant 0 : index
    %21 = vector.load %arg9[%c0_13, %c0_14, %c0_15] : memref<4x8x256xf32, #tpu.memory_space<vmem>>, vector<4x8x256xf32>
    tpu.vector_store %arg9[%c0_13, %c0_14, %c0_15], %20 {strides = array<i32>} : memref<4x8x256xf32, #tpu.memory_space<vmem>>, vector<4x8x256xf32>,
    %22 = vector.extract_strided_slice %20 {offsets = [3, 0, 0], sizes = [1, 8, 256], strides = [1, 1, 1]} : vector<4x8x256xf32> to vector<1x8x256xf32>
    %23 = vector.shape_cast %22 : vector<1x8x256xf32> to vector<8x256xf32>
    %c3 = arith.constant 3 : index
    %24 = memref.load %arg1[%c3] : memref<4xf32, #tpu.memory_space<smem>>
    %cst_16 = arith.constant dense<0.000000e+00> : vector<4x256xf32>
    %25 = tpu.matmul %3, %23, %cst_16 {dimension_numbers = #tpu.dot_dimension_numbers<[1], [0], [0], [1], [0, 0, 1, 1], [], []>} : vector<4x8xf32>, vector<8x256xf32>, vector<4x256xf32> -> vector<4x256xf32>
    %26 = vector.broadcast %4 : vector<4x1xf32> to vector<4x256xf32>
    %27 = arith.addf %25, %26 : vector<4x256xf32>
    %cst_17 = arith.constant dense<0.000000e+00> : vector<16x256xf32>
    %28 = tpu.matmul %1, %27, %cst_17 {dimension_numbers = #tpu.dot_dimension_numbers<[1], [0], [0], [1], [0, 0, 1, 1], [], []>} : vector<16x4xf32>, vector<4x256xf32>, vector<16x256xf32> -> vector<16x256xf32>
    %29 = vector.broadcast %2 : vector<16x1xf32> to vector<16x256xf32>
    %30 = arith.addf %28, %29 : vector<16x256xf32>
    %31 = vector.extract_strided_slice %30 {offsets = [0, 0], sizes = [8, 256], strides = [1, 1]} : vector<16x256xf32> to vector<8x256xf32>
    %32 = arith.subf %31, %23 : vector<8x256xf32>
    %33 = arith.divf %32, %12 : vector<8x256xf32>
    %34 = vector.broadcast %24 : f32 to vector<8x256xf32>
    %35 = arith.mulf %34, %33 : vector<8x256xf32>
    %36 = arith.addf %23, %35 : vector<8x256xf32>
    %cst_18 = arith.constant dense<0.000000e+00> : vector<4x256xf32>
    %37 = tpu.matmul %3, %36, %cst_18 {dimension_numbers = #tpu.dot_dimension_numbers<[1], [0], [0], [1], [0, 0, 1, 1], [], []>} : vector<4x8xf32>, vector<8x256xf32>, vector<4x256xf32> -> vector<4x256xf32>
    %38 = vector.broadcast %4 : vector<4x1xf32> to vector<4x256xf32>
    %39 = arith.addf %37, %38 : vector<4x256xf32>
    %c0_19 = arith.constant 0 : index
    %c0_20 = arith.constant 0 : index
    %40 = vector.load %arg8[%c0_19, %c0_20] : memref<4x256xf32, #tpu.memory_space<vmem>>, vector<4x256xf32>
    tpu.vector_store %arg8[%c0_19, %c0_20], %39 {strides = array<i32>} : memref<4x256xf32, #tpu.memory_space<vmem>>, vector<4x256xf32>,
    return
  }
  func.func @transform_0(%arg0: i32) -> i32 {
    %c0_i32 = arith.constant 0 : i32
    %c0_i32_0 = arith.constant 0 : i32
    return %c0_i32 : i32
  }
  func.func @transform_1(%arg0: i32) -> (i32, i32) {
    %c0_i32 = arith.constant 0 : i32
    %c0_i32_0 = arith.constant 0 : i32
    return %c0_i32, %arg0 : i32, i32
  }
  func.func @transform_2(%arg0: i32) -> (i32, i32) {
    %c0_i32 = arith.constant 0 : i32
    %c0_i32_0 = arith.constant 0 : i32
    %c0_i32_1 = arith.constant 0 : i32
    return %c0_i32, %c0_i32_0 : i32, i32
  }
  func.func @transform_3(%arg0: i32) -> (i32, i32) {
    %c0_i32 = arith.constant 0 : i32
    %c0_i32_0 = arith.constant 0 : i32
    %c0_i32_1 = arith.constant 0 : i32
    return %c0_i32, %c0_i32_0 : i32, i32
  }
  func.func @transform_4(%arg0: i32) -> (i32, i32) {
    %c0_i32 = arith.constant 0 : i32
    %c0_i32_0 = arith.constant 0 : i32
    %c0_i32_1 = arith.constant 0 : i32
    return %c0_i32, %c0_i32_0 : i32, i32
  }
  func.func @transform_5(%arg0: i32) -> (i32, i32) {
    %c0_i32 = arith.constant 0 : i32
    %c0_i32_0 = arith.constant 0 : i32
    %c0_i32_1 = arith.constant 0 : i32
    return %c0_i32, %c0_i32_0 : i32, i32
  }
  func.func @transform_6(%arg0: i32) -> (i32, i32, i32) {
    %c0_i32 = arith.constant 0 : i32
    %c0_i32_0 = arith.constant 0 : i32
    %c0_i32_1 = arith.constant 0 : i32
    return %c0_i32, %c0_i32_0, %arg0 : i32, i32, i32
  }
  func.func @transform_7(%arg0: i32) -> (i32, i32) {
    %c0_i32 = arith.constant 0 : i32
    %c0_i32_0 = arith.constant 0 : i32
    return %c0_i32, %arg0 : i32, i32
  }
  func.func @transform_8(%arg0: i32) -> (i32, i32, i32) {
    %c0_i32 = arith.constant 0 : i32
    %c0_i32_0 = arith.constant 0 : i32
    %c0_i32_1 = arith.constant 0 : i32
    return %c0_i32, %c0_i32_0, %arg0 : i32, i32, i32
  }
}

</mosaic_0001>

<llo_original>
// kernel: tpu_custom_call.1
$region0: #{tpu_custom_call.1}
  #allocation0 [shape = 'u32[]', space=smem, size = 0x4, offset = 0x4, fixed_abs, tag = 'smem constant byte address 0x4 - core index']
  #allocation1 [shape = 'u32[72,128]{1,0:T(1,128)}', space=vmem, size = 0x9000, scoped, tag = 'internal scratch']
  %s0 = inlined_call_operand.vmem [shape: f32[4], index: 0, kind: input, shape index: {}]
  %s1 = inlined_call_operand.vmem [shape: f32[4,512], index: 1, kind: input, shape index: {}]
  %s2 = inlined_call_operand.vmem [shape: f32[16,4], index: 2, kind: input, shape index: {}]
  %s3 = inlined_call_operand.vmem [shape: f32[16,1], index: 3, kind: input, shape index: {}]
  %s4 = inlined_call_operand.vmem [shape: f32[4,8], index: 4, kind: input, shape index: {}]
  %s5 = inlined_call_operand.vmem [shape: f32[4,1], index: 5, kind: input, shape index: {}]
  %s6 = inlined_call_operand.hbm [shape: bf16[4,8,512], index: 6, kind: input, shape index: {}]
  %s7 = inlined_call_operand.hbm [shape: f32[4,512], index: 7, kind: output, shape index: {0}]
  %s8 = inlined_call_operand.hbm [shape: f32[4,8,512], index: 8, kind: output, shape index: {1}]
  %9 = xla_tuple %s7, %s8
  %s10 = sld [smem:[#allocation0]]
  $region77: #{tpu_custom_call.1} parent=0
    _
  %s12 = ssub.s32 1, %s10
  %s13 = scalar_select 0, %s12, %s10
  $region1: #{tpu_custom_call.1} parent=0
    #allocation2 [shape = 'u8[512]{0}', space=smem, size = 0x200, scoped, tag = 'input window, operand 0, single buffered']
    #allocation3 [shape = 's32[2]{0}', space=sflag, size = 0x8, scoped, tag = 'scoped memory for tpu_custom_call.1']
    #allocation4 [shape = 's32[2]{0}', space=sflag, size = 0x8, scoped, tag = 'scoped memory for tpu_custom_call.1']
    #allocation5 [shape = 's32[2]{0}', space=sflag, size = 0x8, scoped, tag = 'scoped memory for tpu_custom_call.1']
    #allocation6 [shape = 'u8[32768]{0}', space=vmem, size = 0x8000, scoped, tag = 'input window, operand 6']
    #allocation7 [shape = 'u8[8192]{0}', space=vmem, size = 0x2000, scoped, tag = 'output window, operand 0']
    #allocation8 [shape = 'u8[65536]{0}', space=vmem, size = 0x10000, scoped, tag = 'output window, operand 1']
    #allocation9 [shape = 's32[2]{0}', space=sflag, size = 0x8, scoped, tag = 'scoped memory for tpu_custom_call.1']
    %14 = vsyncpa [#allocation5], 0
    %15 = vsyncpa [#allocation3], 0
    %s16 = scalar_lea.sflag [#allocation3], 1
    %17 = vsyncpa %s16, 0
    %18 = vsyncpa [#allocation4], 0
    %s19 = scalar_lea.sflag [#allocation4], 1
    %20 = vsyncpa %s19, 0
    %21 = vsyncpa [#allocation9], 0
    %s22 = scalar_lea.sflag [#allocation9], 1
    %23 = vsyncpa %s22, 0
    loop: start=0, step=1, limit=4
    $region2: #{tpu_custom_call.1} parent=1 // loop_pre_header
      _
    $region3: #{tpu_custom_call.1} parent=1 // loop_header
      %s25 = sphi 0, %s29
      %p26 = scmp.ge.s32.totalorder %s25, 4
      %s33 = sphi 0, %s33
      %s35 = sphi 0, %s33
      %s36 = sphi 0, %s35
      %s50 = sphi 0, %s36
      %s56 = sphi 0, %s58
      %s59 = sphi 0, %s56
      %s60 = sphi 0, %s59
      %s76 = sphi 0, %s60
      %s80 = sphi 0, %s80
      %s82 = sphi 0, %s80
      %s83 = sphi 0, %s82
      %s97 = sphi 0, %s83
      %s101 = sphi 0, %s101
      %s103 = sphi 0, %s101
      %s104 = sphi 0, %s103
      %s118 = sphi 0, %s104
      %s122 = sphi 0, %s122
      %s124 = sphi 0, %s122
      %s125 = sphi 0, %s124
      %s139 = sphi 0, %s125
      %s143 = sphi 0, %s143
      %s145 = sphi 0, %s143
      %s146 = sphi 0, %s145
      %s160 = sphi 0, %s146
      %s166 = sphi 0, %s168
      %s169 = sphi 0, %s166
      %s170 = sphi 0, %s169
      %s186 = sphi 0, %s170
      %s192 = sphi 0, %s194
      %s195 = sphi 0, %s192
      %s196 = sphi 0, %s195
      %s212 = sphi 0, %s196
      %s218 = sphi 0, %s220
      %s221 = sphi 0, %s218
      %s222 = sphi 0, %s221
      %s238 = sphi 0, %s222
    $region4: #{tpu_custom_call.1} parent=1 // loop_header_branch
      %28 = sbr.rel (%p26) target = $region8
    $region5: #{tpu_custom_call.1} parent=1 // loop_body
      %s30 = ssub.s32 %s25, 1
      %s31 = ssub.s32 %s25, 2
      %s32 = sadd.s32 %s25, 1
      %s34 = sadd.s32 %s33, 1
      %p37 = scmp.eq.s32.totalorder %s25, 1
      %p38 = scmp.ne.s32.totalorder %s33, %s35
      %p39 = scmp.eq.s32.totalorder %s25, 0
      %p40 = por %p38, %p39
      %p41 = scmp.ne.s32.totalorder %s33, %s35
      %p42 = scmp.eq.s32.totalorder %s30, 1
      %p43 = por %p41, %p42
      %p44 = scmp.ne.s32.totalorder %s35, %s36
      %p45 = scmp.eq.s32.totalorder %s30, 0
      %p46 = por %p44, %p45
      %p47 = scmp.ne.s32.totalorder %s35, %s36
      %p48 = scmp.eq.s32.totalorder %s31, 1
      %p49 = por %p47, %p48
      %p51 = scmp.ne.s32.totalorder %s36, %s50
      %p52 = scmp.eq.s32.totalorder %s31, 0
      %p53 = por %p51, %p52
      %s54 = ssub.s32 %s25, %s32
      %p55 = scmp.eq.s32.totalorder %s54, 0
      %s57 = sadd.s32 %s56, 1
      %s58 = scalar_select %p55, %s56, %s57
      %p61 = pneg %p55
      %p62 = scmp.eq.s32.totalorder %s25, 1
      %p63 = por %p61, %p62
      %p64 = scmp.ne.s32.totalorder %s56, %s59
      %p65 = scmp.eq.s32.totalorder %s25, 0
      %p66 = por %p64, %p65
      %p67 = scmp.ne.s32.totalorder %s56, %s59
      %p68 = scmp.eq.s32.totalorder %s30, 1
      %p69 = por %p67, %p68
      %p70 = scmp.ne.s32.totalorder %s59, %s60
      %p71 = scmp.eq.s32.totalorder %s30, 0
      %p72 = por %p70, %p71
      %p73 = scmp.ne.s32.totalorder %s59, %s60
      %p74 = scmp.eq.s32.totalorder %s31, 1
      %p75 = por %p73, %p74
      %p77 = scmp.ne.s32.totalorder %s60, %s76
      %p78 = scmp.eq.s32.totalorder %s31, 0
      %p79 = por %p77, %p78
      %s81 = sadd.s32 %s80, 1
      %p84 = scmp.eq.s32.totalorder %s25, 1
      %p85 = scmp.ne.s32.totalorder %s80, %s82
      %p86 = scmp.eq.s32.totalorder %s25, 0
      %p87 = por %p85, %p86
      %p88 = scmp.ne.s32.totalorder %s80, %s82
      %p89 = scmp.eq.s32.totalorder %s30, 1
      %p90 = por %p88, %p89
      %p91 = scmp.ne.s32.totalorder %s82, %s83
      %p92 = scmp.eq.s32.totalorder %s30, 0
      %p93 = por %p91, %p92
      %p94 = scmp.ne.s32.totalorder %s82, %s83
      %p95 = scmp.eq.s32.totalorder %s31, 1
      %p96 = por %p94, %p95
      %p98 = scmp.ne.s32.totalorder %s83, %s97
      %p99 = scmp.eq.s32.totalorder %s31, 0
      %p100 = por %p98, %p99
      %s102 = sadd.s32 %s101, 1
      %p105 = scmp.eq.s32.totalorder %s25, 1
      %p106 = scmp.ne.s32.totalorder %s101, %s103
      %p107 = scmp.eq.s32.totalorder %s25, 0
      %p108 = por %p106, %p107
      %p109 = scmp.ne.s32.totalorder %s101, %s103
      %p110 = scmp.eq.s32.totalorder %s30, 1
      %p111 = por %p109, %p110
      %p112 = scmp.ne.s32.totalorder %s103, %s104
      %p113 = scmp.eq.s32.totalorder %s30, 0
      %p114 = por %p112, %p113
      %p115 = scmp.ne.s32.totalorder %s103, %s104
      %p116 = scmp.eq.s32.totalorder %s31, 1
      %p117 = por %p115, %p116
      %p119 = scmp.ne.s32.totalorder %s104, %s118
      %p120 = scmp.eq.s32.totalorder %s31, 0
      %p121 = por %p119, %p120
      %s123 = sadd.s32 %s122, 1
      %p126 = scmp.eq.s32.totalorder %s25, 1
      %p127 = scmp.ne.s32.totalorder %s122, %s124
      %p128 = scmp.eq.s32.totalorder %s25, 0
      %p129 = por %p127, %p128
      %p130 = scmp.ne.s32.totalorder %s122, %s124
      %p131 = scmp.eq.s32.totalorder %s30, 1
      %p132 = por %p130, %p131
      %p133 = scmp.ne.s32.totalorder %s124, %s125
      %p134 = scmp.eq.s32.totalorder %s30, 0
      %p135 = por %p133, %p134
      %p136 = scmp.ne.s32.totalorder %s124, %s125
      %p137 = scmp.eq.s32.totalorder %s31, 1
      %p138 = por %p136, %p137
      %p140 = scmp.ne.s32.totalorder %s125, %s139
      %p141 = scmp.eq.s32.totalorder %s31, 0
      %p142 = por %p140, %p141
      %s144 = sadd.s32 %s143, 1
      %p147 = scmp.eq.s32.totalorder %s25, 1
      %p148 = scmp.ne.s32.totalorder %s143, %s145
      %p149 = scmp.eq.s32.totalorder %s25, 0
      %p150 = por %p148, %p149
      %p151 = scmp.ne.s32.totalorder %s143, %s145
      %p152 = scmp.eq.s32.totalorder %s30, 1
      %p153 = por %p151, %p152
      %p154 = scmp.ne.s32.totalorder %s145, %s146
      %p155 = scmp.eq.s32.totalorder %s30, 0
      %p156 = por %p154, %p155
      %p157 = scmp.ne.s32.totalorder %s145, %s146
      %p158 = scmp.eq.s32.totalorder %s31, 1
      %p159 = por %p157, %p158
      %p161 = scmp.ne.s32.totalorder %s146, %s160
      %p162 = scmp.eq.s32.totalorder %s31, 0
      %p163 = por %p161, %p162
      %s164 = ssub.s32 %s25, %s32
      %p165 = scmp.eq.s32.totalorder %s164, 0
      %s167 = sadd.s32 %s166, 1
      %s168 = scalar_select %p165, %s166, %s167
      %p171 = pneg %p165
      %p172 = scmp.eq.s32.totalorder %s25, 1
      %p173 = por %p171, %p172
      %p174 = scmp.ne.s32.totalorder %s166, %s169
      %p175 = scmp.eq.s32.totalorder %s25, 0
      %p176 = por %p174, %p175
      %p177 = scmp.ne.s32.totalorder %s166, %s169
      %p178 = scmp.eq.s32.totalorder %s30, 1
      %p179 = por %p177, %p178
      %p180 = scmp.ne.s32.totalorder %s169, %s170
      %p181 = scmp.eq.s32.totalorder %s30, 0
      %p182 = por %p180, %p181
      %p183 = scmp.ne.s32.totalorder %s169, %s170
      %p184 = scmp.eq.s32.totalorder %s31, 1
      %p185 = por %p183, %p184
      %p187 = scmp.ne.s32.totalorder %s170, %s186
      %p188 = scmp.eq.s32.totalorder %s31, 0
      %p189 = por %p187, %p188
      %s190 = ssub.s32 %s25, %s32
      %p191 = scmp.eq.s32.totalorder %s190, 0
      %s193 = sadd.s32 %s192, 1
      %s194 = scalar_select %p191, %s192, %s193
      %p197 = pneg %p191
      %p198 = scmp.eq.s32.totalorder %s25, 1
      %p199 = por %p197, %p198
      %p200 = scmp.ne.s32.totalorder %s192, %s195
      %p201 = scmp.eq.s32.totalorder %s25, 0
      %p202 = por %p200, %p201
      %p203 = scmp.ne.s32.totalorder %s192, %s195
      %p204 = scmp.eq.s32.totalorder %s30, 1
      %p205 = por %p203, %p204
      %p206 = scmp.ne.s32.totalorder %s195, %s196
      %p207 = scmp.eq.s32.totalorder %s30, 0
      %p208 = por %p206, %p207
      %p209 = scmp.ne.s32.totalorder %s195, %s196
      %p210 = scmp.eq.s32.totalorder %s31, 1
      %p211 = por %p209, %p210
      %p213 = scmp.ne.s32.totalorder %s196, %s212
      %p214 = scmp.eq.s32.totalorder %s31, 0
      %p215 = por %p213, %p214
      %s216 = ssub.s32 %s25, %s32
      %p217 = scmp.eq.s32.totalorder %s216, 0
      %s219 = sadd.s32 %s218, 1
      %s220 = scalar_select %p217, %s218, %s219
      %p223 = pneg %p217
      %p224 = scmp.eq.s32.totalorder %s25, 1
      %p225 = por %p223, %p224
      %p226 = scmp.ne.s32.totalorder %s218, %s221
      %p227 = scmp.eq.s32.totalorder %s25, 0
      %p228 = por %p226, %p227
      %p229 = scmp.ne.s32.totalorder %s218, %s221
      %p230 = scmp.eq.s32.totalorder %s30, 1
      %p231 = por %p229, %p230
      %p232 = scmp.ne.s32.totalorder %s221, %s222
      %p233 = scmp.eq.s32.totalorder %s30, 0
      %p234 = por %p232, %p233
      %p235 = scmp.ne.s32.totalorder %s221, %s222
      %p236 = scmp.eq.s32.totalorder %s31, 1
      %p237 = por %p235, %p236
      %p239 = scmp.ne.s32.totalorder %s222, %s238
      %p240 = scmp.eq.s32.totalorder %s31, 0
      %p241 = por %p239, %p240
      %p242 = scmp.le.s32.totalorder 1, %s25
      %p243 = scmp.lt.s32.totalorder %s25, 3
      %p244 = pnand %p242, %p243
      %p245 = pneg %p244
      // Predicated region
      $region9: #{tpu_custom_call.1} parent=5 // pred_check
        _
      $region10: #{tpu_custom_call.1} parent=5 // pred_check_branch
        %247 = sbr.rel (%p244) target = $region12
      $region11: #{tpu_custom_call.1} parent=5 // pred_region
        %s248 = ssub.s32 %s25, 1
        // Predicated region
        $region13: #{tpu_custom_call.1} parent=11 // pred_check
          %p249 = pneg %p46
        $region14: #{tpu_custom_call.1} parent=11 // pred_check_branch
          %251 = sbr.rel (%p249) target = $region16
        $region15: #{tpu_custom_call.1} parent=11 // pred_region
          %253 = vsyncadd [#allocation5], 0
          %s255 = sshll.u32 %s0, 4
          %s256 = int_to_ptr.vmem [resolvable:$true] %s255
          %258 = dma.vmem_to_smem %s256, 16, [#allocation2], [#allocation5]
        $region16: #{tpu_custom_call.1} parent=11 // pred_fallthru
          _
        // Predicated region
        $region17: #{tpu_custom_call.1} parent=11 // pred_check
          %p259 = pneg %p93
        $region18: #{tpu_custom_call.1} parent=11 // pred_check_branch
          %261 = sbr.rel (%p259) target = $region20
        $region19: #{tpu_custom_call.1} parent=11 // pred_region
          _
        $region20: #{tpu_custom_call.1} parent=11 // pred_fallthru
          _
        // Predicated region
        $region21: #{tpu_custom_call.1} parent=11 // pred_check
          %p262 = pneg %p114
        $region22: #{tpu_custom_call.1} parent=11 // pred_check_branch
          %264 = sbr.rel (%p262) target = $region24
        $region23: #{tpu_custom_call.1} parent=11 // pred_region
          _
        $region24: #{tpu_custom_call.1} parent=11 // pred_fallthru
          _
        // Predicated region
        $region25: #{tpu_custom_call.1} parent=11 // pred_check
          %p265 = pneg %p135
        $region26: #{tpu_custom_call.1} parent=11 // pred_check_branch
          %267 = sbr.rel (%p265) target = $region28
        $region27: #{tpu_custom_call.1} parent=11 // pred_region
          _
        $region28: #{tpu_custom_call.1} parent=11 // pred_fallthru
          _
        // Predicated region
        $region29: #{tpu_custom_call.1} parent=11 // pred_check
          %p268 = pneg %p156
        $region30: #{tpu_custom_call.1} parent=11 // pred_check_branch
          %270 = sbr.rel (%p268) target = $region32
        $region31: #{tpu_custom_call.1} parent=11 // pred_region
          _
        $region32: #{tpu_custom_call.1} parent=11 // pred_fallthru
          _
      $region12: #{tpu_custom_call.1} parent=5 // pred_fallthru
        _
      %p271 = scmp.lt.s32.totalorder %s25, 2
      // Predicated region
      $region33: #{tpu_custom_call.1} parent=5 // pred_check
        %p272 = pneg %p271
      $region34: #{tpu_custom_call.1} parent=5 // pred_check_branch
        %274 = sbr.rel (%p272) target = $region36
      $region35: #{tpu_custom_call.1} parent=5 // pred_region
        // Predicated region
        $region37: #{tpu_custom_call.1} parent=35 // pred_check
          %p275 = pneg %p66
        $region38: #{tpu_custom_call.1} parent=35 // pred_check_branch
          %277 = sbr.rel (%p275) target = $region40
        $region39: #{tpu_custom_call.1} parent=35 // pred_region
          %s278 = smul.u32 2, %s25
          %p279 = scmp.lt.s32.totalorder %s278, 3
          %s280 = scalar_select %p279, %s278, 3
          %s281 = smul.addr %s280, 4
          %s282 = scalar_lea.vmem %s1, %s281
          %s283 = smul.u32 2, %s25
        $region40: #{tpu_custom_call.1} parent=35 // pred_fallthru
          _
        // Predicated region
        $region41: #{tpu_custom_call.1} parent=35 // pred_check
          %p284 = pneg %p176
        $region42: #{tpu_custom_call.1} parent=35 // pred_check_branch
          %286 = sbr.rel (%p284) target = $region44
        $region43: #{tpu_custom_call.1} parent=35 // pred_region
          %s287 = sand.u32 %s166, 1
          %s288 = scalar_lea.sflag [#allocation3], %s287
          %s289 = sand.u32 %s166, 1
          %s290 = smul.addr %s289, 32
          %s291 = scalar_lea.vmem [#allocation6], %s290
          %s292 = smul.u32 2, %s25
          %294 = vsyncadd %s288, 0
          %s295 = smul.addr %s292, 4
          %s296 = scalar_lea.hbm %s6, %s295
          %s297 = sshll.u32 %s296, 4
          %s298 = int_to_ptr.hbm [resolvable:$true] %s297
          %s299 = sshll.u32 %s291, 4
          %s300 = int_to_ptr.vmem [resolvable:$true] %s299
          %305 = dma.hbm_to_vmem [thread:$0]  %s298, 512, %s300, %s288, 256, 128, 8
        $region44: #{tpu_custom_call.1} parent=35 // pred_fallthru
          _
      $region36: #{tpu_custom_call.1} parent=5 // pred_fallthru
        _
      %p306 = scmp.le.s32.totalorder 1, %s25
      %p307 = scmp.lt.s32.totalorder %s25, 3
      %p308 = pnand %p306, %p307
      %p309 = pneg %p308
      // Predicated region
      $region45: #{tpu_custom_call.1} parent=5 // pred_check
        _
      $region46: #{tpu_custom_call.1} parent=5 // pred_check_branch
        %311 = sbr.rel (%p308) target = $region48
      $region47: #{tpu_custom_call.1} parent=5 // pred_region
        %s312 = ssub.s32 %s25, 1
        // Predicated region
        $region49: #{tpu_custom_call.1} parent=47 // pred_check
          %p313 = pneg %p46
        $region50: #{tpu_custom_call.1} parent=47 // pred_check_branch
          %315 = sbr.rel (%p313) target = $region52
        $region51: #{tpu_custom_call.1} parent=47 // pred_region
          %317 = dma.done [#allocation5], 16
        $region52: #{tpu_custom_call.1} parent=47 // pred_fallthru
          _
        %s318 = sand.u32 %s169, 1
        %s319 = scalar_lea.sflag [#allocation3], %s318
        %s320 = sand.u32 %s169, 1
        %s321 = smul.addr %s320, 32
        %s322 = scalar_lea.vmem [#allocation6], %s321
        // Predicated region
        $region53: #{tpu_custom_call.1} parent=47 // pred_check
          %p323 = pneg %p182
        $region54: #{tpu_custom_call.1} parent=47 // pred_check_branch
          %325 = sbr.rel (%p323) target = $region56
        $region55: #{tpu_custom_call.1} parent=47 // pred_region
          %327 = dma.done %s319, 512
        $region56: #{tpu_custom_call.1} parent=47 // pred_fallthru
          _
        %328 = sfence
        %p329 = pneg %p46
        %p330 = pneg %p43
        %s331 = smul.u32 2, %s30
        %p332 = scmp.lt.s32.totalorder %s331, 3
        %s333 = scalar_select %p332, %s331, 3
        %s334 = smul.addr %s333, 4
        %s335 = scalar_lea.vmem %s1, %s334
        %p336 = pneg %p72
        %p337 = pneg %p69
        %p338 = pneg %p93
        %p339 = pneg %p90
        %p340 = pneg %p114
        %p341 = pneg %p111
        %p342 = pneg %p135
        %p343 = pneg %p132
        %p344 = pneg %p156
        %p345 = pneg %p153
        %s346 = sand.u32 %s169, 1
        %s347 = scalar_lea.sflag [#allocation3], %s346
        %s348 = sand.u32 %s169, 1
        %s349 = smul.addr %s348, 32
        %s350 = scalar_lea.vmem [#allocation6], %s349
        %p351 = pneg %p182
        %p352 = pneg %p179
        %p353 = pneg %p208
        %p354 = pneg %p205
        %s355 = sand.u32 %s195, 1
        %s356 = scalar_lea.sflag [#allocation4], %s355
        %s357 = sand.u32 %s195, 1
        %s358 = smul.addr %s357, 8
        %s359 = scalar_lea.vmem [#allocation7], %s358
        %p360 = pneg %p234
        %p361 = pneg %p231
        %s362 = sand.u32 %s221, 1
        %s363 = scalar_lea.sflag [#allocation9], %s362
        %s364 = sand.u32 %s221, 1
        %s365 = smul.addr %s364, 64
        %s366 = scalar_lea.vmem [#allocation8], %s365
        %s367 = smul.u32 2, %s30
        %p368 = scmp.lt.s32.totalorder %s367, 3
        %s369 = scalar_select %p368, %s367, 3
        %s370 = smul.addr %s369, 4
        %s371 = scalar_lea.vmem %s1, %s370
        %s372 = smul.u32 2, %s30
        %s373 = smul.u32 2, %s30
        %s374 = smul.u32 2, %s30
        %s375 = smul.u32 2, %s30
        %v376 = vld [vmem:[%s371] sm:$0xff]
        %v377 = vld [vmem:[%s2] sm:$0xff]
        %v378 = vld [vmem:[%s2 + $0x8] sm:$0xff]
        %v379 = vld [vmem:[%s3] sm:$0xff]
        %v380 = vld [vmem:[%s3 + $0x8] sm:$0xff]
        %v381 = vld [vmem:[%s4] sm:$0xf]
        %v382 = vld [vmem:[%s5] sm:$0xf]
        %384 = vset.pattern.permute.xlu0 0
        %385 = vperm.xlu0 %384, %v379
        %v386 = vpop.permute.xlu0 %385
        %389 = vset.pattern.permute.xlu0 0
        %390 = vperm.xlu0 %389, %v380
        %v391 = vpop.permute.xlu0 %390
        %394 = vst [vmem:[#allocation1] ss:$2 sm:$0xff] %v376
        %v395 = vld.sshfl [vmem:[#allocation1] sm:$0xff pattern:$0x75316420]
        %v396 = vld.sshfl [vmem:[#allocation1 + $0x8] sm:$0xff pattern:$0x75316420]
        %vm397 = vcmask 31744
        %v399 = vsel %vm397, %v377, 0
        %v402 = vsel %vm397, %v378, 0
        %vm404 = vcmask 1043456
        %v405 = vsel %vm404, %v395, 0
        %v407 = vsel %vm404, %v396, 0
        %409 = vmatpush.msra.mxu0 0.0
        %410 = vmatpush.msra.mxu0 0.0
        %411 = vmatpush.msra.mxu0 0.0
        %412 = vmatpush.msra.mxu0 0.0
        %413 = vmatpush.msra.mxu0 0.0
        %414 = vmatpush.msra.mxu0 0.0
        %415 = vmatpush.msra.mxu0 0.0
        %416 = vmatpush.msra.mxu0 0.0
        %417 = vmatpush.msra.mxu0 0.0
        %418 = vmatpush.msra.mxu0 0.0
        %419 = vmatpush.msra.mxu0 0.0
        %420 = vmatpush.msra.mxu0 0.0
        %421 = vmatpush.msra.mxu0 0.0
        %422 = vmatpush.msra.mxu0 0.0
        %423 = vmatpush.msra.mxu0 0.0
        %424 = vmatpush.msra.mxu0 %v405
        %425 = vmatmul.f32.gmra.mxu0 %v399
        %v426 = vpop.f32.mrf.mxu0
        %v427 = vadd.f32 %v386, %v426
        %428 = vmatmul.f32.gmra.mxu0 %v402
        %v429 = vpop.f32.mrf.mxu0
        %v430 = vadd.f32 %v391, %v429
        %431 = vdwg.mxu0
        %432 = vmatpush.msra.mxu0 0.0
        %433 = vmatpush.msra.mxu0 0.0
        %434 = vmatpush.msra.mxu0 0.0
        %435 = vmatpush.msra.mxu0 0.0
        %436 = vmatpush.msra.mxu0 0.0
        %437 = vmatpush.msra.mxu0 0.0
        %438 = vmatpush.msra.mxu0 0.0
        %439 = vmatpush.msra.mxu0 0.0
        %440 = vmatpush.msra.mxu0 0.0
        %441 = vmatpush.msra.mxu0 0.0
        %442 = vmatpush.msra.mxu0 0.0
        %443 = vmatpush.msra.mxu0 0.0
        %444 = vmatpush.msra.mxu0 0.0
        %445 = vmatpush.msra.mxu0 0.0
        %446 = vmatpush.msra.mxu0 0.0
        %447 = vmatpush.msra.mxu0 %v407
        %448 = vmatmul.f32.gmra.mxu0 %v399
        %v449 = vpop.f32.mrf.mxu0
        %v450 = vadd.f32 %v386, %v449
        %451 = vmatmul.f32.gmra.mxu0 %v402
        %v452 = vpop.f32.mrf.mxu0
        %v453 = vadd.f32 %v391, %v452
        %454 = vdwg.mxu0
        %v455 = vmul.f32 %v430, 0.5
        %v456 = vmul.f32 %v453, 0.5
        %v457 = vmul.f32 %v455, 1.442695
        %v458 = vpow.pop %v457
        %v459 = vmul.f32 %v456, 1.442695
        %v460 = vpow.pop %v459
        %v461 = vld [vmem:[%s322] sm:$0xff]
        %v462 = vld [vmem:[%s322 + $0x8] sm:$0xff]
        %v463 = vld [vmem:[%s322 + $0x10] sm:$0xff]
        %v464 = vld [vmem:[%s322 + $0x18] sm:$0xff]
        %v465 = vunpack.c.l.bf16 %v461
        %v466 = vunpack.c.h.bf16 %v461
        %v467 = vunpack.c.l.bf16 %v462
        %v468 = vunpack.c.h.bf16 %v462
        %v469 = vunpack.c.l.bf16 %v463
        %v470 = vunpack.c.h.bf16 %v463
        %v471 = vunpack.c.l.bf16 %v464
        %v472 = vunpack.c.h.bf16 %v464
        %v473 = vmul.f32 %v458, %v465
        %v474 = vmul.f32 %v460, %v466
        %v475 = vmul.f32 %v458, %v467
        %v476 = vmul.f32 %v460, %v468
        %v477 = vmul.f32 %v458, %v469
        %v478 = vmul.f32 %v460, %v470
        %v479 = vmul.f32 %v458, %v471
        %v480 = vmul.f32 %v460, %v472
        %v481 = vadd.f32 %v427, %v473
        %v482 = vadd.f32 %v450, %v474
        %v483 = vadd.f32 %v427, %v475
        %v484 = vadd.f32 %v450, %v476
        %v485 = vadd.f32 %v427, %v477
        %v486 = vadd.f32 %v450, %v478
        %v487 = vadd.f32 %v427, %v479
        %v488 = vadd.f32 %v450, %v480
        %489 = vst [vmem:[%s366] sm:$0xff] %v481
        %490 = vst [vmem:[%s366 + $0x8] sm:$0xff] %v482
        %491 = vst [vmem:[%s366 + $0x10] sm:$0xff] %v483
        %492 = vst [vmem:[%s366 + $0x18] sm:$0xff] %v484
        %493 = vst [vmem:[%s366 + $0x20] sm:$0xff] %v485
        %494 = vst [vmem:[%s366 + $0x28] sm:$0xff] %v486
        %495 = vst [vmem:[%s366 + $0x30] sm:$0xff] %v487
        %496 = vst [vmem:[%s366 + $0x38] sm:$0xff] %v488
        %s497 = sld [smem:[#allocation2 + $0x3]]
        %499 = vset.pattern.permute.xlu0 0
        %500 = vperm.xlu0 %499, %v382
        %v501 = vpop.permute.xlu0 %500
        %vm503 = vcmask 64512
        %v505 = vsel %vm503, %v381, 0
        %507 = vmatpush.msra.mxu0 0.0
        %508 = vmatpush.msra.mxu0 0.0
        %509 = vmatpush.msra.mxu0 0.0
        %510 = vmatpush.msra.mxu0 0.0
        %511 = vmatpush.msra.mxu0 0.0
        %512 = vmatpush.msra.mxu0 0.0
        %513 = vmatpush.msra.mxu0 0.0
        %514 = vmatpush.msra.mxu0 0.0
        %515 = vmatpush.msra.mxu0 0.0
        %516 = vmatpush.msra.mxu0 0.0
        %517 = vmatpush.msra.mxu0 0.0
        %518 = vmatpush.msra.mxu0 0.0
        %519 = vmatpush.msra.mxu0 0.0
        %520 = vmatpush.msra.mxu0 0.0
        %521 = vmatpush.msra.mxu0 0.0
        %522 = vmatpush.msra.mxu0 %v487
        %523 = vmatmul.f32.gmra.mxu0 %v505
        %v524 = vpop.f32.mrf.mxu0
        %v525 = vadd.f32 %v501, %v524
        %526 = vdwg.mxu0
        %527 = vmatpush.msra.mxu0 0.0
        %528 = vmatpush.msra.mxu0 0.0
        %529 = vmatpush.msra.mxu0 0.0
        %530 = vmatpush.msra.mxu0 0.0
        %531 = vmatpush.msra.mxu0 0.0
        %532 = vmatpush.msra.mxu0 0.0
        %533 = vmatpush.msra.mxu0 0.0
        %534 = vmatpush.msra.mxu0 0.0
        %535 = vmatpush.msra.mxu0 0.0
        %536 = vmatpush.msra.mxu0 0.0
        %537 = vmatpush.msra.mxu0 0.0
        %538 = vmatpush.msra.mxu0 0.0
        %539 = vmatpush.msra.mxu0 0.0
        %540 = vmatpush.msra.mxu0 0.0
        %541 = vmatpush.msra.mxu0 0.0
        %542 = vmatpush.msra.mxu0 %v488
        %543 = vmatmul.f32.gmra.mxu0 %v505
        %v544 = vpop.f32.mrf.mxu0
        %v545 = vadd.f32 %v501, %v544
        %546 = vdwg.mxu0
        %v548 = vsel %vm404, %v525, 0
        %v551 = vsel %vm404, %v545, 0
        %553 = vmatpush.msra.mxu0 0.0
        %554 = vmatpush.msra.mxu0 0.0
        %555 = vmatpush.msra.mxu0 0.0
        %556 = vmatpush.msra.mxu0 0.0
        %557 = vmatpush.msra.mxu0 0.0
        %558 = vmatpush.msra.mxu0 0.0
        %559 = vmatpush.msra.mxu0 0.0
        %560 = vmatpush.msra.mxu0 0.0
        %561 = vmatpush.msra.mxu0 0.0
        %562 = vmatpush.msra.mxu0 0.0
        %563 = vmatpush.msra.mxu0 0.0
        %564 = vmatpush.msra.mxu0 0.0
        %565 = vmatpush.msra.mxu0 0.0
        %566 = vmatpush.msra.mxu0 0.0
        %567 = vmatpush.msra.mxu0 0.0
        %568 = vmatpush.msra.mxu0 %v548
        %569 = vmatmul.f32.gmra.mxu0 %v399
        %v570 = vpop.f32.mrf.mxu0
        %v571 = vadd.f32 %v386, %v570
        %572 = vmatmul.f32.gmra.mxu0 %v402
        %v573 = vpop.f32.mrf.mxu0
        %574 = vdwg.mxu0
        %575 = vmatpush.msra.mxu0 0.0
        %576 = vmatpush.msra.mxu0 0.0
        %577 = vmatpush.msra.mxu0 0.0
        %578 = vmatpush.msra.mxu0 0.0
        %579 = vmatpush.msra.mxu0 0.0
        %580 = vmatpush.msra.mxu0 0.0
        %581 = vmatpush.msra.mxu0 0.0
        %582 = vmatpush.msra.mxu0 0.0
        %583 = vmatpush.msra.mxu0 0.0
        %584 = vmatpush.msra.mxu0 0.0
        %585 = vmatpush.msra.mxu0 0.0
        %586 = vmatpush.msra.mxu0 0.0
        %587 = vmatpush.msra.mxu0 0.0
        %588 = vmatpush.msra.mxu0 0.0
        %589 = vmatpush.msra.mxu0 0.0
        %590 = vmatpush.msra.mxu0 %v551
        %591 = vmatmul.f32.gmra.mxu0 %v399
        %v592 = vpop.f32.mrf.mxu0
        %v593 = vadd.f32 %v386, %v592
        %594 = vmatmul.f32.gmra.mxu0 %v402
        %v595 = vpop.f32.mrf.mxu0
        %596 = vdwg.mxu0
        %v597 = vsub.f32 %v571, %v487
        %v598 = vsub.f32 %v593, %v488
        %v599 = vrcp.pop %v458
        %v600 = vmul.f32 %v458, %v599
        %v601 = vsub.f32 1.0, %v600
        %v602 = vmul.f32 %v599, %v601
        %v603 = vadd.f32 %v599, %v602
        %vm604 = vweird.f32 %v458
        %vm605 = vweird.f32 %v599
        %vm606 = vmor %vm604, %vm605
        %v607 = vsel %vm606, %v599, %v603
        %v608 = vand.u32 2147483647, %v458
        %vm609 = vcmp.eq.f32.partialorder %v608, 8.507059e+37
        %v610 = vand.u32 %v458, 2147483648
        %v611 = vor.u32 1.1754944e-38, %v610
        %v612 = vsel %vm609, %v611, %v607
        %v613 = vmul.f32 %v597, %v612
        %v614 = vrcp.pop %v460
        %v615 = vmul.f32 %v460, %v614
        %v616 = vsub.f32 1.0, %v615
        %v617 = vmul.f32 %v614, %v616
        %v618 = vadd.f32 %v614, %v617
        %vm619 = vweird.f32 %v460
        %vm620 = vweird.f32 %v614
        %vm621 = vmor %vm619, %vm620
        %v622 = vsel %vm621, %v614, %v618
        %v623 = vand.u32 2147483647, %v460
        %vm624 = vcmp.eq.f32.partialorder %v623, 8.507059e+37
        %v625 = vand.u32 %v460, 2147483648
        %v626 = vor.u32 1.1754944e-38, %v625
        %v627 = vsel %vm624, %v626, %v622
        %v628 = vmul.f32 %v598, %v627
        %v629 = vstv %s497
        %v630 = vmul.f32 %v629, %v613
        %v631 = vmul.f32 %v629, %v628
        %v632 = vadd.f32 %v487, %v630
        %v633 = vadd.f32 %v488, %v631
        %634 = vmatpush.msra.mxu0 0.0
        %635 = vmatpush.msra.mxu0 0.0
        %636 = vmatpush.msra.mxu0 0.0
        %637 = vmatpush.msra.mxu0 0.0
        %638 = vmatpush.msra.mxu0 0.0
        %639 = vmatpush.msra.mxu0 0.0
        %640 = vmatpush.msra.mxu0 0.0
        %641 = vmatpush.msra.mxu0 0.0
        %642 = vmatpush.msra.mxu0 0.0
        %643 = vmatpush.msra.mxu0 0.0
        %644 = vmatpush.msra.mxu0 0.0
        %645 = vmatpush.msra.mxu0 0.0
        %646 = vmatpush.msra.mxu0 0.0
        %647 = vmatpush.msra.mxu0 0.0
        %648 = vmatpush.msra.mxu0 0.0
        %649 = vmatpush.msra.mxu0 %v632
        %650 = vmatmul.f32.gmra.mxu0 %v505
        %v651 = vpop.f32.mrf.mxu0
        %v652 = vadd.f32 %v501, %v651
        %653 = vdwg.mxu0
        %654 = vmatpush.msra.mxu0 0.0
        %655 = vmatpush.msra.mxu0 0.0
        %656 = vmatpush.msra.mxu0 0.0
        %657 = vmatpush.msra.mxu0 0.0
        %658 = vmatpush.msra.mxu0 0.0
        %659 = vmatpush.msra.mxu0 0.0
        %660 = vmatpush.msra.mxu0 0.0
        %661 = vmatpush.msra.mxu0 0.0
        %662 = vmatpush.msra.mxu0 0.0
        %663 = vmatpush.msra.mxu0 0.0
        %664 = vmatpush.msra.mxu0 0.0
        %665 = vmatpush.msra.mxu0 0.0
        %666 = vmatpush.msra.mxu0 0.0
        %667 = vmatpush.msra.mxu0 0.0
        %668 = vmatpush.msra.mxu0 0.0
        %669 = vmatpush.msra.mxu0 %v633
        %670 = vmatmul.f32.gmra.mxu0 %v505
        %v671 = vpop.f32.mrf.mxu0
        %v672 = vadd.f32 %v501, %v671
        %673 = vdwg.mxu0
        %v676 = vrot.slane %v672, 4
        %v677 = vsel %vm404, %v652, %v676
        %679 = vst [vmem:[%s359] sm:$0xff] %v677
        %s680 = sand.u32 %s195, 1
        %s681 = scalar_lea.sflag [#allocation4], %s680
        %s682 = sand.u32 %s195, 1
        %s683 = smul.addr %s682, 8
        %s684 = scalar_lea.vmem [#allocation7], %s683
        %s685 = sand.u32 %s221, 1
        %s686 = scalar_lea.sflag [#allocation9], %s685
        %s687 = sand.u32 %s221, 1
        %s688 = smul.addr %s687, 64
        %s689 = scalar_lea.vmem [#allocation8], %s688
        // Predicated region
        $region57: #{tpu_custom_call.1} parent=47 // pred_check
          %p690 = pneg %p205
        $region58: #{tpu_custom_call.1} parent=47 // pred_check_branch
          %692 = sbr.rel (%p690) target = $region60
        $region59: #{tpu_custom_call.1} parent=47 // pred_region
          %s693 = smul.u32 2, %s30
          %695 = vsyncadd %s681, 0
          %s696 = smul.addr %s693, 4
          %s697 = scalar_lea.hbm %s7, %s696
          %s699 = sshll.u32 %s684, 4
          %s700 = int_to_ptr.vmem [resolvable:$true] %s699
          %s701 = sshll.u32 %s697, 4
          %s702 = int_to_ptr.hbm [resolvable:$true] %s701
          %704 = dma.vmem_to_hbm [thread:$0]  %s700, 128, %s702, %s681
        $region60: #{tpu_custom_call.1} parent=47 // pred_fallthru
          _
        // Predicated region
        $region61: #{tpu_custom_call.1} parent=47 // pred_check
          %p705 = pneg %p231
        $region62: #{tpu_custom_call.1} parent=47 // pred_check_branch
          %707 = sbr.rel (%p705) target = $region64
        $region63: #{tpu_custom_call.1} parent=47 // pred_region
          %s708 = smul.u32 2, %s30
          %710 = vsyncadd %s686, 0
          %s711 = smul.addr %s708, 8
          %s712 = scalar_lea.hbm %s8, %s711
          %s713 = sshll.u32 %s689, 4
          %s714 = int_to_ptr.vmem [resolvable:$true] %s713
          %s715 = sshll.u32 %s712, 4
          %s716 = int_to_ptr.hbm [resolvable:$true] %s715
          %721 = dma.vmem_to_hbm [thread:$0]  %s714, 1024, %s716, %s686, 256, 512, 16
        $region64: #{tpu_custom_call.1} parent=47 // pred_fallthru
          _
      $region48: #{tpu_custom_call.1} parent=5 // pred_fallthru
        _
      %p722 = scmp.le.s32.totalorder 2, %s25
      // Predicated region
      $region65: #{tpu_custom_call.1} parent=5 // pred_check
        %p723 = pneg %p722
      $region66: #{tpu_custom_call.1} parent=5 // pred_check_branch
        %725 = sbr.rel (%p723) target = $region68
      $region67: #{tpu_custom_call.1} parent=5 // pred_region
        %s726 = ssub.s32 %s25, 2
        // Predicated region
        $region69: #{tpu_custom_call.1} parent=67 // pred_check
          %p727 = pneg %p211
        $region70: #{tpu_custom_call.1} parent=67 // pred_check_branch
          %729 = sbr.rel (%p727) target = $region72
        $region71: #{tpu_custom_call.1} parent=67 // pred_region
          %s730 = sand.u32 %s196, 1
          %s731 = scalar_lea.sflag [#allocation4], %s730
          %s732 = sand.u32 %s196, 1
          %s733 = smul.addr %s732, 8
          %s734 = scalar_lea.vmem [#allocation7], %s733
          %736 = dma.done %s731, 128
        $region72: #{tpu_custom_call.1} parent=67 // pred_fallthru
          _
        // Predicated region
        $region73: #{tpu_custom_call.1} parent=67 // pred_check
          %p737 = pneg %p237
        $region74: #{tpu_custom_call.1} parent=67 // pred_check_branch
          %739 = sbr.rel (%p737) target = $region76
        $region75: #{tpu_custom_call.1} parent=67 // pred_region
          %s740 = sand.u32 %s222, 1
          %s741 = scalar_lea.sflag [#allocation9], %s740
          %s742 = sand.u32 %s222, 1
          %s743 = smul.addr %s742, 64
          %s744 = scalar_lea.vmem [#allocation8], %s743
          %746 = dma.done %s741, 1024
        $region76: #{tpu_custom_call.1} parent=67 // pred_fallthru
          _
      $region68: #{tpu_custom_call.1} parent=5 // pred_fallthru
        _
    $region6: #{tpu_custom_call.1} parent=1 // loop_footer
      %s29 = sadd.s32 1, %s25
    $region7: #{tpu_custom_call.1} parent=1 // loop_footer_branch
      %24 = sbr.rel target = $region3
    $region8: #{tpu_custom_call.1} parent=1 // loop_exit
      _
    %747 = vsyncpa [#allocation3], 1
    %s748 = scalar_lea.sflag [#allocation3], 1
    %749 = vsyncpa %s748, 1
    %750 = vsyncpa [#allocation4], 1
    %s751 = scalar_lea.sflag [#allocation4], 1
    %752 = vsyncpa %s751, 1
    %753 = vsyncpa [#allocation9], 1
    %s754 = scalar_lea.sflag [#allocation9], 1
    %755 = vsyncpa %s754, 1
    %756 = vsyncpa [#allocation5], 1
    %s757 = scalar_lea.sflag [#allocation5], 1
    %758 = vsyncpa %s757, 1

</llo_original>
